<compile_context>
chip_gen: v6e
topology: v6e:2x2x1
jax: 0.10.0
libtpu: 0.0.40
codegen_flags: <defaults>
</compile_context>

<pallas_src>
import functools

import jax
import jax.numpy as jnp
import numpy as np
from jax.experimental import pallas as pl
from jax.experimental.pallas import tpu as pltpu


# ----------------------------------------------------------------------------
# Irreps bookkeeping (static, pure Python) — equivalent of Irreps(...).simplify()
# ----------------------------------------------------------------------------
def irreps_dims(irreps):
    """irreps: list of (mul, l). Returns (in_dim, out_dim)."""
    in_dim = sum(mul * (2 * l + 1) for mul, l in irreps)
    out_dim = sum(mul for mul, _ in irreps)
    return in_dim, out_dim


def build_segment_matrix(irreps, dtype=jnp.float32):
    """Static (D, n_out) 0/1 matrix mapping feature components -> irrep slots."""
    in_dim, out_dim = irreps_dims(irreps)
    seg = np.zeros((in_dim, out_dim), dtype=np.float32)
    f_off = 0
    o_off = 0
    for mul, l in irreps:
        d = 2 * l + 1
        for u in range(mul):
            seg[f_off + u * d : f_off + (u + 1) * d, o_off + u] = 1.0
        f_off += mul * d
        o_off += mul
    return jnp.asarray(seg, dtype=dtype)


# ----------------------------------------------------------------------------
# Pallas kernel
# ----------------------------------------------------------------------------
def _norm_kernel(x_ref, s_ref, o_ref, *, squared: bool):
    x = x_ref[...].astype(jnp.float32)
    sq = x * x                                                           # VPU
    out = jnp.dot(sq, s_ref[...], preferred_element_type=jnp.float32)   # MXU segment-sum
    if not squared:
        out = jnp.sqrt(jnp.maximum(out, 0.0))                           # relu().sqrt()
    o_ref[...] = out.astype(o_ref.dtype)


# ----------------------------------------------------------------------------
# Tile-size selection: largest batch tile that keeps double-buffered VMEM
# inside the (portable) scoped-VMEM limit.
# ----------------------------------------------------------------------------
def _round_up(x, m):
    return ((x + m - 1) // m) * m


def _pick_batch_tile(B, in_dim, out_dim, x_itemsize, out_itemsize,
                     batch_tile, vmem_limit_bytes):
    seg_bytes = 2 * in_dim * out_dim * 4                # seg matrix (count 2x buffers)
    per_row = 2 * in_dim * x_itemsize + 2 * out_dim * out_itemsize  # x + out, double-buffered
    budget = int(0.75 * vmem_limit_bytes) - seg_bytes   # leave headroom for compiler scratch
    cap = max(8, (budget // max(per_row, 1)) // 8 * 8)
    tb = min(batch_tile, cap, _round_up(B, 8))          # don't over-allocate for tiny batches
    tb = max(8, (tb // 8) * 8)                          # keep sublane alignment
    return tb


def norm_forward(features, irreps, squared=False, *,
                 batch_tile=512, vmem_limit_bytes=48 * 1024 * 1024):
    """Pallas equivalent of e3nn Norm(irreps, squared)(features).

    features: jnp array of shape (..., D) with D = irreps_in.dim
    returns:  jnp array of shape (..., n_out) with n_out = sum of multiplicities
    """
    in_dim, out_dim = irreps_dims(irreps)
    assert features.shape[-1] == in_dim, (features.shape, in_dim)

    lead_shape = features.shape[:-1]
    x2d = features.reshape((-1, in_dim))
    B = x2d.shape[0]

    x_itemsize = jnp.dtype(x2d.dtype).itemsize
    out_itemsize = jnp.dtype(features.dtype).itemsize
    tb = _pick_batch_tile(B, in_dim, out_dim, x_itemsize, out_itemsize,
                          batch_tile, vmem_limit_bytes)
    grid = (pl.cdiv(B, tb),)

    seg = build_segment_matrix(irreps, dtype=jnp.float32)

    kernel = functools.partial(_norm_kernel, squared=squared)

    cost = pl.CostEstimate(
        flops=2 * B * in_dim * out_dim + B * in_dim,
        transcendentals=0 if squared else B * out_dim,
        bytes_accessed=B * in_dim * x_itemsize
        + B * out_dim * out_itemsize
        + in_dim * out_dim * 4,
    )

    out2d = pl.pallas_call(
        kernel,
        out_shape=jax.ShapeDtypeStruct((B, out_dim), features.dtype),
        grid_spec=pltpu.PrefetchScalarGridSpec(
            num_scalar_prefetch=0,
            grid=grid,
            in_specs=[
                pl.BlockSpec((tb, in_dim), lambda i: (i, 0)),       # x tile (ragged tail OK)
                pl.BlockSpec((in_dim, out_dim), lambda i: (0, 0)),  # segment matrix (resident)
            ],
            out_specs=pl.BlockSpec((tb, out_dim), lambda i: (i, 0)),
        ),
        compiler_params=pltpu.CompilerParams(
            dimension_semantics=("parallel",),
            vmem_limit_bytes=vmem_limit_bytes,
        ),
        cost_estimate=cost,
    )(x2d, seg)

    return out2d.reshape(lead_shape + (out_dim,))


# ----------------------------------------------------------------------------
# Pure-JAX reference (mirrors the PyTorch module's math) for verification.
# ----------------------------------------------------------------------------
def norm_reference(features, irreps, squared=False):
    lead = features.shape[:-1]
    outs = []
    off = 0
    for mul, l in irreps:
        d = 2 * l + 1
        blk = features[..., off : off + mul * d].reshape(lead + (mul, d))
        sq = jnp.sum(blk.astype(jnp.float32) ** 2, axis=-1)
        outs.append(sq)
        off += mul * d
    out = jnp.concatenate(outs, axis=-1)
    if not squared:
        out = jnp.sqrt(jnp.maximum(out, 0.0))
    return out.astype(features.dtype)


if __name__ == "__main__":
    # irreps_in = "4x0e + 4x1o + 2x2e"  ->  dim = 4*1 + 4*3 + 2*5 = 26, out = 10
    irreps = [(4, 0), (4, 1), (2, 2)]

    key = jax.random.PRNGKey(0)
    k1, k2 = jax.random.split(key)

    # Case 1: small leading dims, default (auto-capped) tile.
    x = jax.random.normal(k1, (2, 8, 26), dtype=jnp.float32)  # (..., irreps.dim)
    y = jax.block_until_ready(norm_forward(x, irreps, squared=False))
    y_ref = norm_reference(x, irreps, squared=False)
    assert y.shape == (2, 8, 10), y.shape
    assert jnp.allclose(y, y_ref, atol=1e-5, rtol=1e-5), "mismatch vs reference"

    # squared=True path
    ys = jax.block_until_ready(norm_forward(x, irreps, squared=True))
    ys_ref = norm_reference(x, irreps, squared=True)
    assert jnp.allclose(ys, ys_ref, atol=1e-5, rtol=1e-5), "squared mismatch"

    # Case 2: batch not a multiple of the tile -> exercises the ragged last
    # block (Pallas block padding + masked writeback), no wrapper-side padding.
    x2 = jax.random.normal(k2, (20, 26), dtype=jnp.float32)
    y2 = jax.block_until_ready(norm_forward(x2, irreps, squared=False, batch_tile=8))
    y2_ref = norm_reference(x2, irreps, squared=False)
    assert y2.shape == (20, 10), y2.shape
    assert jnp.allclose(y2, y2_ref, atol=1e-5, rtol=1e-5), "ragged-tail mismatch"

    print("KERNEL_OK")
</pallas_src>

<mosaic_0001>
module attributes {stable_mosaic.version = 11 : i64} {
  func.func @_norm_kernel(%arg0: i32, %arg1: memref<16x26xf32, #tpu.memory_space<vmem>>, %arg2: memref<26x10xf32, #tpu.memory_space<vmem>>, %arg3: memref<16x10xf32, #tpu.memory_space<vmem>>) attributes {dimension_semantics = [#tpu.dimension_semantics<parallel>], iteration_bounds = array<i64: 1>, scalar_prefetch = 0 : i64, scratch_operands = 0 : i64, tpu.core_type = #tpu.core_type<tc>, window_params = [{transform_indices = @transform_0, window_bounds = array<i64: 16, 26>}, {pipeline_mode = #tpu.pipeline_mode<synchronous>, transform_indices = @transform_1, window_bounds = array<i64: 26, 10>}, {transform_indices = @transform_2, window_bounds = array<i64: 16, 10>}]} {
    %c0 = arith.constant 0 : index
    %c0_0 = arith.constant 0 : index
    %0 = vector.load %arg1[%c0, %c0_0] : memref<16x26xf32, #tpu.memory_space<vmem>>, vector<16x26xf32>
    %1 = arith.mulf %0, %0 : vector<16x26xf32>
    %c0_1 = arith.constant 0 : index
    %c0_2 = arith.constant 0 : index
    %2 = vector.load %arg2[%c0_1, %c0_2] : memref<26x10xf32, #tpu.memory_space<vmem>>, vector<26x10xf32>
    %cst = arith.constant dense<0.000000e+00> : vector<16x10xf32>
    %3 = tpu.matmul %1, %2, %cst {dimension_numbers = #tpu.dot_dimension_numbers<[1], [0], [0], [1], [0, 0, 1, 1], [], []>} : vector<16x26xf32>, vector<26x10xf32>, vector<16x10xf32> -> vector<16x10xf32>
    %cst_3 = arith.constant 0.000000e+00 : f32
    %4 = vector.broadcast %cst_3 : f32 to vector<16x10xf32>
    %5 = arith.maximumf %3, %4 : vector<16x10xf32>
    %6 = math.sqrt %5 : vector<16x10xf32>
    %c0_4 = arith.constant 0 : index
    %c0_5 = arith.constant 0 : index
    %7 = vector.load %arg3[%c0_4, %c0_5] : memref<16x10xf32, #tpu.memory_space<vmem>>, vector<16x10xf32>
    tpu.vector_store %arg3[%c0_4, %c0_5], %6 {strides = array<i32>} : memref<16x10xf32, #tpu.memory_space<vmem>>, vector<16x10xf32>,
    return
  }
  func.func @transform_0(%arg0: i32) -> (i32, i32) {
    %c0_i32 = arith.constant 0 : i32
    %c0_i32_0 = arith.constant 0 : i32
    return %arg0, %c0_i32 : i32, i32
  }
  func.func @transform_1(%arg0: i32) -> (i32, i32) {
    %c0_i32 = arith.constant 0 : i32
    %c0_i32_0 = arith.constant 0 : i32
    %c0_i32_1 = arith.constant 0 : i32
    return %c0_i32, %c0_i32_0 : i32, i32
  }
  func.func @transform_2(%arg0: i32) -> (i32, i32) {
    %c0_i32 = arith.constant 0 : i32
    %c0_i32_0 = arith.constant 0 : i32
    return %arg0, %c0_i32 : i32, i32
  }
}

</mosaic_0001>

<llo_original>
// kernel: tpu_custom_call.1
$region0: #{tpu_custom_call.1}
  #allocation0 [shape = 'u32[]', space=smem, size = 0x4, offset = 0x4, fixed_abs, tag = 'smem constant byte address 0x4 - core index']
  #allocation1 [shape = 'u32[144,128]{1,0:T(1,128)}', space=vmem, size = 0x12000, scoped, tag = 'internal scratch']
  %s0 = inlined_call_operand.vmem [shape: f32[16,26], index: 0, kind: input, shape index: {}]
  %s1 = inlined_call_operand.vmem [shape: f32[26,10], index: 1, kind: input, shape index: {}]
  %s2 = inlined_call_operand.hbm [shape: f32[16,10], index: 2, kind: output, shape index: {}]
  %s3 = sld [smem:[#allocation0]]
  $region18: #{tpu_custom_call.1} parent=0
    _
  %s5 = ssub.s32 1, %s3
  %s6 = scalar_select 0, %s5, %s3
  $region1: #{tpu_custom_call.1} parent=0
    #allocation2 [shape = 'u8[8192]{0}', space=vmem, size = 0x2000, scoped, tag = 'output window, operand 0, single buffered']
    #allocation3 [shape = 's32[1]{0}', space=sflag, size = 0x4, scoped, tag = 'scoped memory for tpu_custom_call.1']
    %7 = vsyncpa [#allocation3], 0
    // Predicated region
    $region2: #{tpu_custom_call.1} parent=1 // pred_check
      _
    $region3: #{tpu_custom_call.1} parent=1 // pred_check_branch
      %9 = sbr.rel (0) target = $region5
    $region4: #{tpu_custom_call.1} parent=1 // pred_region
      _
    $region5: #{tpu_custom_call.1} parent=1 // pred_fallthru
      _
    // Predicated region
    $region6: #{tpu_custom_call.1} parent=1 // pred_check
      _
    $region7: #{tpu_custom_call.1} parent=1 // pred_check_branch
      %11 = sbr.rel (0) target = $region9
    $region8: #{tpu_custom_call.1} parent=1 // pred_region
      _
    $region9: #{tpu_custom_call.1} parent=1 // pred_fallthru
      _
    %v12 = vld [vmem:[%s0] sm:$0xff]
    %v13 = vld [vmem:[%s0 + $0x8] sm:$0xff]
    %v14 = vmul.f32 %v12, %v12
    %v15 = vmul.f32 %v13, %v13
    %v16 = vld [vmem:[%s1] sm:$0xff]
    %v17 = vld [vmem:[%s1 + $0x8] sm:$0xff]
    %v18 = vld [vmem:[%s1 + $0x10] sm:$0xff]
    %v19 = vld [vmem:[%s1 + $0x18] sm:$0x3]
    %vm20 = vcmask 211968
    %v22 = vsel %vm20, %v14, 0
    %v25 = vsel %vm20, %v15, 0
    %vm27 = vcmask 1041408
    %v29 = vsel %vm27, %v19, 0
    %31 = vmatprep.subr.mxu0 0.0
    %32 = vmatpush1.msra.mxu0 0.0
    %33 = vmatprep.subr.mxu0 0.0
    %34 = vmatpush1.msra.mxu0 0.0
    %35 = vmatprep.subr.mxu0 0.0
    %36 = vmatpush1.msra.mxu0 0.0
    %37 = vmatprep.subr.mxu0 0.0
    %38 = vmatpush1.msra.mxu0 0.0
    %39 = vmatprep.subr.mxu0 0.0
    %40 = vmatpush1.msra.mxu0 0.0
    %41 = vmatprep.subr.mxu0 0.0
    %42 = vmatpush1.msra.mxu0 0.0
    %43 = vmatprep.subr.mxu0 0.0
    %44 = vmatpush1.msra.mxu0 0.0
    %45 = vmatprep.subr.mxu0 0.0
    %46 = vmatpush1.msra.mxu0 0.0
    %47 = vmatprep.subr.mxu0 0.0
    %48 = vmatpush1.msra.mxu0 0.0
    %49 = vmatprep.subr.mxu0 0.0
    %50 = vmatpush1.msra.mxu0 0.0
    %51 = vmatprep.subr.mxu0 0.0
    %52 = vmatpush1.msra.mxu0 0.0
    %53 = vmatprep.subr.mxu0 0.0
    %54 = vmatpush1.msra.mxu0 0.0
    %55 = vmatprep.subr.mxu0 0.0
    %56 = vmatpush1.msra.mxu0 %v29
    %57 = vmatprep.subr.mxu0 0.0
    %58 = vmatpush1.msra.mxu0 %v18
    %59 = vmatprep.subr.mxu0 0.0
    %60 = vmatpush1.msra.mxu0 %v17
    %61 = vmatprep.subr.mxu0 0.0
    %62 = vmatpush1.msra.mxu0 %v16
    %63 = vmatprep.subr.mxu0 0.0
    %64 = vmatpush2.msra.mxu0 0.0
    %65 = vmatprep.subr.mxu0 0.0
    %66 = vmatpush2.msra.mxu0 0.0
    %67 = vmatprep.subr.mxu0 0.0
    %68 = vmatpush2.msra.mxu0 0.0
    %69 = vmatprep.subr.mxu0 0.0
    %70 = vmatpush2.msra.mxu0 0.0
    %71 = vmatprep.subr.mxu0 0.0
    %72 = vmatpush2.msra.mxu0 0.0
    %73 = vmatprep.subr.mxu0 0.0
    %74 = vmatpush2.msra.mxu0 0.0
    %75 = vmatprep.subr.mxu0 0.0
    %76 = vmatpush2.msra.mxu0 0.0
    %77 = vmatprep.subr.mxu0 0.0
    %78 = vmatpush2.msra.mxu0 0.0
    %79 = vmatprep.subr.mxu0 0.0
    %80 = vmatpush2.msra.mxu0 0.0
    %81 = vmatprep.subr.mxu0 0.0
    %82 = vmatpush2.msra.mxu0 0.0
    %83 = vmatprep.subr.mxu0 0.0
    %84 = vmatpush2.msra.mxu0 0.0
    %85 = vmatprep.subr.mxu0 0.0
    %86 = vmatpush2.msra.mxu0 0.0
    %87 = vmatprep.subr.mxu0 0.0
    %88 = vmatpush2.msra.mxu0 0.0
    %89 = vmatprep.subr.mxu0 0.0
    %90 = vmatpush2.msra.mxu0 0.0
    %91 = vmatprep.subr.mxu0 0.0
    %92 = vmatpush2.msra.mxu0 0.0
    %93 = vmatprep.subr.mxu0 0.0
    %94 = vmatpush2.msra.mxu0 0.0
    %95 = vmatprep.mubr.f32.mxu0 0.0
    %96 = vmatmul.mubr.f32.gmra.mxu0 %v22
    %v97 = vpop.f32.mrf.mxu0
    %v98 = vadd.f32 0.0, %v97
    %v99 = vpop.f32.mrf.mxu0
    %100 = vmatprep.mubr.f32.mxu0 0.0
    %101 = vmatmul.mubr.f32.gmra.mxu0 %v25
    %v102 = vpop.f32.mrf.mxu0
    %v103 = vadd.f32 0.0, %v102
    %v104 = vpop.f32.mrf.mxu0
    %105 = vdwg.mxu0
    %v106 = vmax.f32 %v98, 0.0
    %v107 = vmax.f32 %v103, 0.0
    %v108 = vrsqrt.pop %v106
    %v109 = vmul.f32 %v106, %v108
    %vm110 = vcmp.eq.f32.partialorder %v106, inf
    %v111 = vsel %vm110, %v106, %v109
    %vm112 = vcmp.eq.f32.partialorder %v106, 0.0
    %v113 = vand.u32 %v106, 2147483648
    %v114 = vsel %vm112, %v113, %v111
    %v115 = vrsqrt.pop %v107
    %v116 = vmul.f32 %v107, %v115
    %vm117 = vcmp.eq.f32.partialorder %v107, inf
    %v118 = vsel %vm117, %v107, %v116
    %vm119 = vcmp.eq.f32.partialorder %v107, 0.0
    %v120 = vand.u32 %v107, 2147483648
    %v121 = vsel %vm119, %v120, %v118
    %vm122 = vcmask 80896
    %123 = vst.msk [vmem:[#allocation2] sm:$0xff] %vm122, %v114
    %124 = vst.msk [vmem:[#allocation2 + $0x8] sm:$0xff] %vm122, %v121
    // Predicated region
    $region10: #{tpu_custom_call.1} parent=1 // pred_check
      _
    $region11: #{tpu_custom_call.1} parent=1 // pred_check_branch
      %126 = sbr.rel (0) target = $region13
    $region12: #{tpu_custom_call.1} parent=1 // pred_region
      %s128 = ssub.s32 256, 256
      %129 = vsyncadd [#allocation3], %s128
      %s130 = sshll.u32 [#allocation2], 4
      %s131 = int_to_ptr.vmem [resolvable:$true] %s130
      %136 = dma.vmem_to_hbm [thread:$0]  %s131, 256, %s2, [#allocation3], 128, 128, 8
    $region13: #{tpu_custom_call.1} parent=1 // pred_fallthru
      _
    // Predicated region
    $region14: #{tpu_custom_call.1} parent=1 // pred_check
      _
    $region15: #{tpu_custom_call.1} parent=1 // pred_check_branch
      %138 = sbr.rel (0) target = $region17
    $region16: #{tpu_custom_call.1} parent=1 // pred_region
      %139 = dma.done [#allocation3], 256
    $region17: #{tpu_custom_call.1} parent=1 // pred_fallthru
      _
    %140 = vsyncpa [#allocation3], 1

</llo_original>
